<compile_context>
chip_gen: v5e
topology: v5e:2x2
jax: 0.10.0
libtpu: 0.0.40
codegen_flags: <defaults>
</compile_context>

<pallas_src>
import jax
import jax.numpy as jnp
from jax import lax
from jax.experimental import pallas as pl
from jax.experimental.pallas import tpu as pltpu


def _make_kernel(batch, tb, tiles_per_split):
    def kernel(yhat_ref, y_ref, out_ref, num_acc, den_acc, lse_acc):
        sp = pl.program_id(0)   # split: parallel across TensorCores
        it = pl.program_id(1)   # batch tile within the split: sequential

        @pl.when(it == 0)
        def _init():
            num_acc[...] = jnp.zeros_like(num_acc)
            den_acc[...] = jnp.zeros_like(den_acc)
            lse_acc[...] = jnp.zeros_like(lse_acc)

        # Logical first row of this tile (clamped overhang tiles keep their
        # logical row0 >= batch, so they are fully masked below).
        row0 = (sp * tiles_per_split + it) * tb

        def accumulate(mask_rows):
            yhat = yhat_ref[...].astype(jnp.float32)
            y = y_ref[...].astype(jnp.float32)
            if mask_rows:
                # Zero BOTH arrays for rows past the true batch so Inf/NaN
                # garbage from out-of-bounds block reads cannot reach the
                # accumulators.
                rows = row0 + lax.broadcasted_iota(jnp.int32, (tb, 1), 0)
                valid = rows < batch
                yhat = jnp.where(valid, yhat, 0.0)
                y = jnp.where(valid, y, 0.0)

            # Numerically stable log_softmax pieces; `logp` never materialized:
            #   sum_j y_j*logp_j = sum_j y_j*(yhat_j - m) - (sum_j y_j)*lse
            m = jnp.max(yhat, axis=-1, keepdims=True)                  # (tb, 1)
            shifted = yhat - m                                         # (tb, C)
            lse = jnp.log(jnp.sum(jnp.exp(shifted), axis=-1, keepdims=True))
            rowsum_y = jnp.sum(y, axis=-1, keepdims=True)              # (tb, 1)

            num_acc[...] += jnp.sum(y * shifted, axis=0, keepdims=True)
            lse_acc[...] += jnp.sum(rowsum_y * lse, axis=0, keepdims=True)
            den_acc[...] += jnp.sum(rowsum_y, axis=0, keepdims=True)

        interior = row0 + tb <= batch

        @pl.when(interior)
        def _fast():
            accumulate(False)     # unmasked fast path: no iota/compare/select

        @pl.when(jnp.logical_not(interior))
        def _tail():
            accumulate(True)      # tail / clamped-overhang path

        @pl.when(it == pl.num_programs(1) - 1)
        def _finalize():
            out_ref[0, 0] = jnp.sum(num_acc[...]) - jnp.sum(lse_acc[...])
            out_ref[0, 1] = jnp.sum(den_acc[...])

    return kernel


def _vmem_budgets():
    """(tile-sizing VMEM budget, pallas vmem_limit_bytes) for this chip."""
    phys = 64 * 1024 * 1024                         # safe default (v7x per-TC)
    try:
        phys = int(pltpu.get_tpu_info().vmem_capacity_bytes)
    except Exception:
        pass
    if phys >= 100 * 1024 * 1024:                   # v5e / v6e: 128 MiB VMEM
        return 72 * 1024 * 1024, 96 * 1024 * 1024
    return 40 * 1024 * 1024, 56 * 1024 * 1024       # v7x: 64 MiB per TC


def _choose_tile(B, C, itemsize, vmem_budget,
                 target_hbm_bytes_per_step=8 * 1024 * 1024):
    """Pick the batch-tile height tb (rows per grid step)."""
    c_pad = -(-C // 128) * 128                      # lane-padded class width
    # VMEM per row: 2 inputs x 2 pipeline buffers at the *input* dtype, plus
    # ~6 lane-padded f32 temporaries (shifted / exp / product / row stats).
    vmem_per_row = 2 * 2 * c_pad * itemsize + 6 * c_pad * 4
    tb_vmem = vmem_budget // vmem_per_row
    # Real HBM traffic per row (unpadded, actual dtype): both arrays read once.
    tb_hbm = target_hbm_bytes_per_step // (2 * C * itemsize)
    tb = max(16, (min(tb_vmem, tb_hbm) // 16) * 16)   # x16: bf16-legal sublanes
    b_pad = -(-B // 16) * 16
    return min(tb, b_pad)


def soft_cross_entropy_loss(y_hat, y, *, tb=None, num_splits=2,
                            vmem_limit_bytes=None):
    """y_hat, y: [B, C] (f32 or bf16). Returns scalar f32 loss."""
    B, C = y_hat.shape
    assert y.shape == (B, C)

    tile_budget, default_limit = _vmem_budgets()
    if vmem_limit_bytes is None:
        vmem_limit_bytes = default_limit
    if tb is None:
        tb = _choose_tile(B, C, y_hat.dtype.itemsize, tile_budget)
    tb = max(16, (tb // 16) * 16)

    num_tiles = pl.cdiv(B, tb)
    num_splits = max(1, min(num_splits, num_tiles))
    tiles_per_split = pl.cdiv(num_tiles, num_splits)
    last_tile = num_tiles - 1

    def in_map(sp, it):
        t = sp * tiles_per_split + it
        return (jnp.minimum(t, last_tile), 0)   # clamp overhang tiles

    kernel = _make_kernel(B, tb, tiles_per_split)

    partials = pl.pallas_call(
        kernel,
        out_shape=jax.ShapeDtypeStruct((num_splits, 2), jnp.float32),
        grid_spec=pltpu.PrefetchScalarGridSpec(
            num_scalar_prefetch=0,
            grid=(num_splits, tiles_per_split),
            in_specs=[
                pl.BlockSpec((tb, C), in_map),
                pl.BlockSpec((tb, C), in_map),
            ],
            out_specs=pl.BlockSpec((1, 2), lambda sp, it: (sp, 0),
                                   memory_space=pltpu.SMEM),
            scratch_shapes=[
                pltpu.VMEM((1, C), jnp.float32),   # per-class sum of y*shifted
                pltpu.VMEM((1, 1), jnp.float32),   # sum of rowsum_y (den)
                pltpu.VMEM((1, 1), jnp.float32),   # sum of rowsum_y * lse
            ],
        ),
        compiler_params=pltpu.CompilerParams(
            dimension_semantics=("parallel", "arbitrary"),
            vmem_limit_bytes=vmem_limit_bytes,
        ),
    )(y_hat, y)

    num = jnp.sum(partials[:, 0])
    den = jnp.sum(partials[:, 1])
    return -num / den


def _reference(y_hat, y):
    p = jax.nn.log_softmax(y_hat.astype(jnp.float32), axis=1)
    yf = y.astype(jnp.float32)
    return -(yf * p).sum() / yf.sum()


if __name__ == "__main__":
    key = jax.random.PRNGKey(0)
    k1, k2, k3, k4 = jax.random.split(key, 4)

    # Case 1: small shapes consistent with the module (soft teacher targets).
    B, C = 16, 32
    y_hat = jax.random.normal(k1, (B, C), dtype=jnp.float32)
    y = jax.nn.softmax(jax.random.normal(k2, (B, C), dtype=jnp.float32), axis=1)
    loss = jax.block_until_ready(soft_cross_entropy_loss(y_hat, y))
    ref = jax.block_until_ready(_reference(y_hat, y))
    assert jnp.allclose(loss, ref, rtol=1e-5, atol=1e-5), (loss, ref)

    # Case 2: batch not divisible by the tile; exercises the parallel split,
    # the unmasked fast path, the gated tail mask, and clamped overhang tiles.
    B2, C2 = 100, 32
    y_hat2 = jax.random.normal(k3, (B2, C2), dtype=jnp.float32)
    y2 = jax.nn.softmax(jax.random.normal(k4, (B2, C2), dtype=jnp.float32),
                        axis=1)
    loss2 = jax.block_until_ready(
        soft_cross_entropy_loss(y_hat2, y2, tb=16, num_splits=2))
    ref2 = jax.block_until_ready(_reference(y_hat2, y2))
    assert jnp.allclose(loss2, ref2, rtol=1e-5, atol=1e-5), (loss2, ref2)

    # Case 3: bf16 inputs (halves HBM traffic); in-kernel compute stays f32.
    loss3 = jax.block_until_ready(
        soft_cross_entropy_loss(y_hat.astype(jnp.bfloat16),
                                y.astype(jnp.bfloat16)))
    ref3 = jax.block_until_ready(
        _reference(y_hat.astype(jnp.bfloat16), y.astype(jnp.bfloat16)))
    assert jnp.allclose(loss3, ref3, rtol=1e-4, atol=1e-4), (loss3, ref3)

    print("KERNEL_OK")
</pallas_src>

<mosaic_0001>
module attributes {stable_mosaic.version = 11 : i64} {
  func.func @kernel(%arg0: i32, %arg1: i32, %arg2: memref<16x32xf32, #tpu.memory_space<vmem>>, %arg3: memref<16x32xf32, #tpu.memory_space<vmem>>, %arg4: memref<1x2xf32, #tpu.memory_space<smem>>, %arg5: memref<1x32xf32, #tpu.memory_space<vmem>>, %arg6: memref<1x1xf32, #tpu.memory_space<vmem>>, %arg7: memref<1x1xf32, #tpu.memory_space<vmem>>) attributes {dimension_semantics = [#tpu.dimension_semantics<parallel>, #tpu.dimension_semantics<arbitrary>], iteration_bounds = array<i64: 1, 1>, scalar_prefetch = 0 : i64, scratch_operands = 3 : i64, tpu.core_type = #tpu.core_type<tc>, window_params = [{transform_indices = @transform_0, window_bounds = array<i64: 16, 32>}, {transform_indices = @transform_1, window_bounds = array<i64: 16, 32>}, {transform_indices = @transform_2, window_bounds = array<i64: 1, 2>}]} {
    %c0_i32 = arith.constant 0 : i32
    %0 = arith.cmpi eq, %arg1, %c0_i32 : i32
    %1 = arith.extui %0 : i1 to i32
    %c0_i32_0 = arith.constant 0 : i32
    %2 = arith.cmpi ne, %1, %c0_i32_0 : i32
    scf.if %2 {
      %cst = arith.constant 0.000000e+00 : f32
      %16 = vector.broadcast %cst : f32 to vector<1x32xf32>
      %c0 = arith.constant 0 : index
      %c0_7 = arith.constant 0 : index
      %17 = vector.load %arg5[%c0, %c0_7] : memref<1x32xf32, #tpu.memory_space<vmem>>, vector<1x32xf32>
      tpu.vector_store %arg5[%c0, %c0_7], %16 {strides = array<i32>} : memref<1x32xf32, #tpu.memory_space<vmem>>, vector<1x32xf32>,
      %cst_8 = arith.constant 0.000000e+00 : f32
      %18 = vector.broadcast %cst_8 : f32 to vector<1x1xf32>
      %c0_9 = arith.constant 0 : index
      %c0_10 = arith.constant 0 : index
      %19 = vector.load %arg6[%c0_9, %c0_10] : memref<1x1xf32, #tpu.memory_space<vmem>>, vector<1x1xf32>
      tpu.vector_store %arg6[%c0_9, %c0_10], %18 {strides = array<i32>} : memref<1x1xf32, #tpu.memory_space<vmem>>, vector<1x1xf32>,
      %cst_11 = arith.constant 0.000000e+00 : f32
      %20 = vector.broadcast %cst_11 : f32 to vector<1x1xf32>
      %c0_12 = arith.constant 0 : index
      %c0_13 = arith.constant 0 : index
      %21 = vector.load %arg7[%c0_12, %c0_13] : memref<1x1xf32, #tpu.memory_space<vmem>>, vector<1x1xf32>
      tpu.vector_store %arg7[%c0_12, %c0_13], %20 {strides = array<i32>} : memref<1x1xf32, #tpu.memory_space<vmem>>, vector<1x1xf32>,
    } else {
    }
    %c1_i32 = arith.constant 1 : i32
    %3 = arith.muli %arg0, %c1_i32 : i32
    %4 = arith.addi %3, %arg1 : i32
    %c16_i32 = arith.constant 16 : i32
    %5 = arith.muli %4, %c16_i32 : i32
    %c16_i32_1 = arith.constant 16 : i32
    %6 = arith.addi %5, %c16_i32_1 : i32
    %c16_i32_2 = arith.constant 16 : i32
    %7 = arith.cmpi sle, %6, %c16_i32_2 : i32
    %8 = arith.extui %7 : i1 to i32
    %c0_i32_3 = arith.constant 0 : i32
    %9 = arith.cmpi ne, %8, %c0_i32_3 : i32
    scf.if %9 {
      %c0 = arith.constant 0 : index
      %c0_7 = arith.constant 0 : index
      %16 = vector.load %arg2[%c0, %c0_7] : memref<16x32xf32, #tpu.memory_space<vmem>>, vector<16x32xf32>
      %c0_8 = arith.constant 0 : index
      %c0_9 = arith.constant 0 : index
      %17 = vector.load %arg3[%c0_8, %c0_9] : memref<16x32xf32, #tpu.memory_space<vmem>>, vector<16x32xf32>
      %cst = arith.constant dense<0xFF800000> : vector<16xf32>
      %18 = vector.multi_reduction <maximumf>, %16, %cst [1] : vector<16x32xf32> to vector<16xf32>
      %19 = vector.shape_cast %18 : vector<16xf32> to vector<16x1xf32>
      %20 = vector.broadcast %19 : vector<16x1xf32> to vector<16x32xf32>
      %21 = arith.subf %16, %20 : vector<16x32xf32>
      %22 = math.exp %21 : vector<16x32xf32>
      %cst_10 = arith.constant dense<0.000000e+00> : vector<16xf32>
      %23 = vector.multi_reduction <add>, %22, %cst_10 [1] : vector<16x32xf32> to vector<16xf32>
      %24 = vector.shape_cast %23 : vector<16xf32> to vector<16x1xf32>
      %25 = math.log %24 : vector<16x1xf32>
      %cst_11 = arith.constant dense<0.000000e+00> : vector<16xf32>
      %26 = vector.multi_reduction <add>, %17, %cst_11 [1] : vector<16x32xf32> to vector<16xf32>
      %27 = vector.shape_cast %26 : vector<16xf32> to vector<16x1xf32>
      %c0_12 = arith.constant 0 : index
      %c0_13 = arith.constant 0 : index
      %28 = vector.load %arg5[%c0_12, %c0_13] : memref<1x32xf32, #tpu.memory_space<vmem>>, vector<1x32xf32>
      %29 = arith.mulf %17, %21 : vector<16x32xf32>
      %cst_14 = arith.constant dense<0.000000e+00> : vector<32xf32>
      %30 = vector.multi_reduction <add>, %29, %cst_14 [0] : vector<16x32xf32> to vector<32xf32>
      %31 = vector.shape_cast %30 : vector<32xf32> to vector<1x32xf32>
      %32 = arith.addf %28, %31 : vector<1x32xf32>
      %c0_15 = arith.constant 0 : index
      %c0_16 = arith.constant 0 : index
      %33 = vector.load %arg5[%c0_15, %c0_16] : memref<1x32xf32, #tpu.memory_space<vmem>>, vector<1x32xf32>
      tpu.vector_store %arg5[%c0_15, %c0_16], %32 {strides = array<i32>} : memref<1x32xf32, #tpu.memory_space<vmem>>, vector<1x32xf32>,
      %c0_17 = arith.constant 0 : index
      %c0_18 = arith.constant 0 : index
      %34 = vector.load %arg7[%c0_17, %c0_18] : memref<1x1xf32, #tpu.memory_space<vmem>>, vector<1x1xf32>
      %35 = arith.mulf %27, %25 : vector<16x1xf32>
      %cst_19 = arith.constant dense<0.000000e+00> : vector<1xf32>
      %36 = vector.multi_reduction <add>, %35, %cst_19 [0] : vector<16x1xf32> to vector<1xf32>
      %37 = vector.shape_cast %36 : vector<1xf32> to vector<1x1xf32>
      %38 = arith.addf %34, %37 : vector<1x1xf32>
      %c0_20 = arith.constant 0 : index
      %c0_21 = arith.constant 0 : index
      %39 = vector.load %arg7[%c0_20, %c0_21] : memref<1x1xf32, #tpu.memory_space<vmem>>, vector<1x1xf32>
      tpu.vector_store %arg7[%c0_20, %c0_21], %38 {strides = array<i32>} : memref<1x1xf32, #tpu.memory_space<vmem>>, vector<1x1xf32>,
      %c0_22 = arith.constant 0 : index
      %c0_23 = arith.constant 0 : index
      %40 = vector.load %arg6[%c0_22, %c0_23] : memref<1x1xf32, #tpu.memory_space<vmem>>, vector<1x1xf32>
      %cst_24 = arith.constant dense<0.000000e+00> : vector<1xf32>
      %41 = vector.multi_reduction <add>, %27, %cst_24 [0] : vector<16x1xf32> to vector<1xf32>
      %42 = vector.shape_cast %41 : vector<1xf32> to vector<1x1xf32>
      %43 = arith.addf %40, %42 : vector<1x1xf32>
      %c0_25 = arith.constant 0 : index
      %c0_26 = arith.constant 0 : index
      %44 = vector.load %arg6[%c0_25, %c0_26] : memref<1x1xf32, #tpu.memory_space<vmem>>, vector<1x1xf32>
      tpu.vector_store %arg6[%c0_25, %c0_26], %43 {strides = array<i32>} : memref<1x1xf32, #tpu.memory_space<vmem>>, vector<1x1xf32>,
    } else {
    }
    %true = arith.constant true
    %10 = arith.xori %7, %true : i1
    %11 = arith.extui %10 : i1 to i32
    %c0_i32_4 = arith.constant 0 : i32
    %12 = arith.cmpi ne, %11, %c0_i32_4 : i32
    scf.if %12 {
      %c0 = arith.constant 0 : index
      %c0_7 = arith.constant 0 : index
      %16 = vector.load %arg2[%c0, %c0_7] : memref<16x32xf32, #tpu.memory_space<vmem>>, vector<16x32xf32>
      %c0_8 = arith.constant 0 : index
      %c0_9 = arith.constant 0 : index
      %17 = vector.load %arg3[%c0_8, %c0_9] : memref<16x32xf32, #tpu.memory_space<vmem>>, vector<16x32xf32>
      %18 = tpu.iota {dimensions = array<i32: 0>} : vector<16x1xi32>
      %19 = vector.broadcast %5 : i32 to vector<16x1xi32>
      %20 = arith.addi %19, %18 : vector<16x1xi32>
      %c16_i32_10 = arith.constant 16 : i32
      %21 = vector.broadcast %c16_i32_10 : i32 to vector<16x1xi32>
      %22 = arith.cmpi slt, %20, %21 : vector<16x1xi32>
      %cst = arith.constant 0.000000e+00 : f32
      %23 = vector.shape_cast %22 : vector<16x1xi1> to vector<16x1xi1>
      %24 = vector.broadcast %23 : vector<16x1xi1> to vector<16x32xi1>
      %25 = vector.broadcast %cst : f32 to vector<16x32xf32>
      %26 = arith.select %24, %16, %25 : vector<16x32xi1>, vector<16x32xf32>
      %cst_11 = arith.constant 0.000000e+00 : f32
      %27 = vector.shape_cast %22 : vector<16x1xi1> to vector<16x1xi1>
      %28 = vector.broadcast %27 : vector<16x1xi1> to vector<16x32xi1>
      %29 = vector.broadcast %cst_11 : f32 to vector<16x32xf32>
      %30 = arith.select %28, %17, %29 : vector<16x32xi1>, vector<16x32xf32>
      %cst_12 = arith.constant dense<0xFF800000> : vector<16xf32>
      %31 = vector.multi_reduction <maximumf>, %26, %cst_12 [1] : vector<16x32xf32> to vector<16xf32>
      %32 = vector.shape_cast %31 : vector<16xf32> to vector<16x1xf32>
      %33 = vector.broadcast %32 : vector<16x1xf32> to vector<16x32xf32>
      %34 = arith.subf %26, %33 : vector<16x32xf32>
      %35 = math.exp %34 : vector<16x32xf32>
      %cst_13 = arith.constant dense<0.000000e+00> : vector<16xf32>
      %36 = vector.multi_reduction <add>, %35, %cst_13 [1] : vector<16x32xf32> to vector<16xf32>
      %37 = vector.shape_cast %36 : vector<16xf32> to vector<16x1xf32>
      %38 = math.log %37 : vector<16x1xf32>
      %cst_14 = arith.constant dense<0.000000e+00> : vector<16xf32>
      %39 = vector.multi_reduction <add>, %30, %cst_14 [1] : vector<16x32xf32> to vector<16xf32>
      %40 = vector.shape_cast %39 : vector<16xf32> to vector<16x1xf32>
      %c0_15 = arith.constant 0 : index
      %c0_16 = arith.constant 0 : index
      %41 = vector.load %arg5[%c0_15, %c0_16] : memref<1x32xf32, #tpu.memory_space<vmem>>, vector<1x32xf32>
      %42 = arith.mulf %30, %34 : vector<16x32xf32>
      %cst_17 = arith.constant dense<0.000000e+00> : vector<32xf32>
      %43 = vector.multi_reduction <add>, %42, %cst_17 [0] : vector<16x32xf32> to vector<32xf32>
      %44 = vector.shape_cast %43 : vector<32xf32> to vector<1x32xf32>
      %45 = arith.addf %41, %44 : vector<1x32xf32>
      %c0_18 = arith.constant 0 : index
      %c0_19 = arith.constant 0 : index
      %46 = vector.load %arg5[%c0_18, %c0_19] : memref<1x32xf32, #tpu.memory_space<vmem>>, vector<1x32xf32>
      tpu.vector_store %arg5[%c0_18, %c0_19], %45 {strides = array<i32>} : memref<1x32xf32, #tpu.memory_space<vmem>>, vector<1x32xf32>,
      %c0_20 = arith.constant 0 : index
      %c0_21 = arith.constant 0 : index
      %47 = vector.load %arg7[%c0_20, %c0_21] : memref<1x1xf32, #tpu.memory_space<vmem>>, vector<1x1xf32>
      %48 = arith.mulf %40, %38 : vector<16x1xf32>
      %cst_22 = arith.constant dense<0.000000e+00> : vector<1xf32>
      %49 = vector.multi_reduction <add>, %48, %cst_22 [0] : vector<16x1xf32> to vector<1xf32>
      %50 = vector.shape_cast %49 : vector<1xf32> to vector<1x1xf32>
      %51 = arith.addf %47, %50 : vector<1x1xf32>
      %c0_23 = arith.constant 0 : index
      %c0_24 = arith.constant 0 : index
      %52 = vector.load %arg7[%c0_23, %c0_24] : memref<1x1xf32, #tpu.memory_space<vmem>>, vector<1x1xf32>
      tpu.vector_store %arg7[%c0_23, %c0_24], %51 {strides = array<i32>} : memref<1x1xf32, #tpu.memory_space<vmem>>, vector<1x1xf32>,
      %c0_25 = arith.constant 0 : index
      %c0_26 = arith.constant 0 : index
      %53 = vector.load %arg6[%c0_25, %c0_26] : memref<1x1xf32, #tpu.memory_space<vmem>>, vector<1x1xf32>
      %cst_27 = arith.constant dense<0.000000e+00> : vector<1xf32>
      %54 = vector.multi_reduction <add>, %40, %cst_27 [0] : vector<16x1xf32> to vector<1xf32>
      %55 = vector.shape_cast %54 : vector<1xf32> to vector<1x1xf32>
      %56 = arith.addf %53, %55 : vector<1x1xf32>
      %c0_28 = arith.constant 0 : index
      %c0_29 = arith.constant 0 : index
      %57 = vector.load %arg6[%c0_28, %c0_29] : memref<1x1xf32, #tpu.memory_space<vmem>>, vector<1x1xf32>
      tpu.vector_store %arg6[%c0_28, %c0_29], %56 {strides = array<i32>} : memref<1x1xf32, #tpu.memory_space<vmem>>, vector<1x1xf32>,
    } else {
    }
    %c0_i32_5 = arith.constant 0 : i32
    %13 = arith.cmpi eq, %arg1, %c0_i32_5 : i32
    %14 = arith.extui %13 : i1 to i32
    %c0_i32_6 = arith.constant 0 : i32
    %15 = arith.cmpi ne, %14, %c0_i32_6 : i32
    scf.if %15 {
      %c0 = arith.constant 0 : index
      %c0_7 = arith.constant 0 : index
      %16 = vector.load %arg5[%c0, %c0_7] : memref<1x32xf32, #tpu.memory_space<vmem>>, vector<1x32xf32>
      %17 = vector.shape_cast %16 : vector<1x32xf32> to vector<1x1x32xf32>
      %cst = arith.constant dense<0.000000e+00> : vector<1xf32>
      %18 = vector.multi_reduction <add>, %17, %cst [1, 2] : vector<1x1x32xf32> to vector<1xf32>
      %19 = vector.shape_cast %18 : vector<1xf32> to vector<1x1x1xf32>
      %20 = vector.extract %19[0, 0, 0] : f32 from vector<1x1x1xf32>
      %c0_8 = arith.constant 0 : index
      %c0_9 = arith.constant 0 : index
      %21 = vector.load %arg7[%c0_8, %c0_9] : memref<1x1xf32, #tpu.memory_space<vmem>>, vector<1x1xf32>
      %22 = vector.shape_cast %21 : vector<1x1xf32> to vector<1x1x1xf32>
      %cst_10 = arith.constant dense<0.000000e+00> : vector<1xf32>
      %23 = vector.multi_reduction <add>, %22, %cst_10 [1, 2] : vector<1x1x1xf32> to vector<1xf32>
      %24 = vector.shape_cast %23 : vector<1xf32> to vector<1x1x1xf32>
      %25 = vector.extract %24[0, 0, 0] : f32 from vector<1x1x1xf32>
      %26 = arith.subf %20, %25 : f32
      %c0_11 = arith.constant 0 : index
      %c0_12 = arith.constant 0 : index
      %27 = memref.load %arg4[%c0_11, %c0_12] : memref<1x2xf32, #tpu.memory_space<smem>>
      memref.store %26, %arg4[%c0_11, %c0_12] : memref<1x2xf32, #tpu.memory_space<smem>>
      %c0_13 = arith.constant 0 : index
      %c0_14 = arith.constant 0 : index
      %28 = vector.load %arg6[%c0_13, %c0_14] : memref<1x1xf32, #tpu.memory_space<vmem>>, vector<1x1xf32>
      %29 = vector.shape_cast %28 : vector<1x1xf32> to vector<1x1x1xf32>
      %cst_15 = arith.constant dense<0.000000e+00> : vector<1xf32>
      %30 = vector.multi_reduction <add>, %29, %cst_15 [1, 2] : vector<1x1x1xf32> to vector<1xf32>
      %31 = vector.shape_cast %30 : vector<1xf32> to vector<1x1x1xf32>
      %32 = vector.extract %31[0, 0, 0] : f32 from vector<1x1x1xf32>
      %c0_16 = arith.constant 0 : index
      %c1 = arith.constant 1 : index
      %33 = memref.load %arg4[%c0_16, %c1] : memref<1x2xf32, #tpu.memory_space<smem>>
      memref.store %32, %arg4[%c0_16, %c1] : memref<1x2xf32, #tpu.memory_space<smem>>
    } else {
    }
    return
  }
  func.func @transform_0(%arg0: i32, %arg1: i32) -> (i32, i32) {
    %c1_i32 = arith.constant 1 : i32
    %0 = arith.muli %arg0, %c1_i32 : i32
    %1 = arith.addi %0, %arg1 : i32
    %c0_i32 = arith.constant 0 : i32
    %2 = arith.minsi %1, %c0_i32 : i32
    %c0_i32_0 = arith.constant 0 : i32
    %c0_i32_1 = arith.constant 0 : i32
    return %2, %c0_i32_0 : i32, i32
  }
  func.func @transform_1(%arg0: i32, %arg1: i32) -> (i32, i32) {
    %c1_i32 = arith.constant 1 : i32
    %0 = arith.muli %arg0, %c1_i32 : i32
    %1 = arith.addi %0, %arg1 : i32
    %c0_i32 = arith.constant 0 : i32
    %2 = arith.minsi %1, %c0_i32 : i32
    %c0_i32_0 = arith.constant 0 : i32
    %c0_i32_1 = arith.constant 0 : i32
    return %2, %c0_i32_0 : i32, i32
  }
  func.func @transform_2(%arg0: i32, %arg1: i32) -> (i32, i32) {
    %c0_i32 = arith.constant 0 : i32
    %c0_i32_0 = arith.constant 0 : i32
    return %arg0, %c0_i32 : i32, i32
  }
}

</mosaic_0001>

<llo_original>
// kernel: tpu_custom_call.1
$region0: #{tpu_custom_call.1}
  #allocation0 [shape = 'u32[]', space=smem, size = 0x4, offset = 0x4, fixed_abs, tag = 'smem constant byte address 0x4 - core index']
  #allocation1 [shape = 'u32[72,128]{1,0:T(1,128)}', space=vmem, size = 0x9000, scoped, tag = 'internal scratch']
  #allocation2 [shape = 'f32[1,32]{1,0:T(1,128)}', space=vmem, size = 0x200, scoped, tag = 'scratch operand']
  #allocation3 [shape = 'f32[1,1]{1,0:T(1,128)}', space=vmem, size = 0x200, scoped, tag = 'scratch operand']
  #allocation4 [shape = 'f32[1,1]{1,0:T(1,128)}', space=vmem, size = 0x200, scoped, tag = 'scratch operand']
  %s0 = inlined_call_operand.hbm [shape: f32[16,32], index: 0, kind: input, shape index: {}]
  %s1 = inlined_call_operand.hbm [shape: f32[16,32], index: 1, kind: input, shape index: {}]
  %s2 = inlined_call_operand.hbm [shape: f32[1,2], index: 2, kind: output, shape index: {}]
  %s3 = sld [smem:[#allocation0]]
  $region42: #{tpu_custom_call.1} parent=0
    _
  %s5 = ssub.s32 1, %s3
  %s6 = scalar_select 0, %s5, %s3
  $region1: #{tpu_custom_call.1} parent=0
    #allocation5 [shape = 'u8[8192]{0}', space=vmem, size = 0x2000, scoped, tag = 'input window, operand 0, single buffered']
    #allocation6 [shape = 's32[1]{0}', space=sflag, size = 0x4, scoped, tag = 'scoped memory for tpu_custom_call.1']
    #allocation7 [shape = 's32[1]{0}', space=sflag, size = 0x4, scoped, tag = 'scoped memory for tpu_custom_call.1']
    #allocation8 [shape = 'u8[8192]{0}', space=vmem, size = 0x2000, scoped, tag = 'input window, operand 1, single buffered']
    #allocation9 [shape = 's32[1]{0}', space=sflag, size = 0x4, scoped, tag = 'scoped memory for tpu_custom_call.1']
    #allocation10 [shape = 'u8[512]{0}', space=smem, size = 0x200, scoped, tag = 'output window, operand 0, single buffered']
    %7 = vsyncpa [#allocation6], 0
    %8 = vsyncpa [#allocation9], 0
    %9 = vsyncpa [#allocation7], 0
    // Predicated region
    $region2: #{tpu_custom_call.1} parent=1 // pred_check
      _
    $region3: #{tpu_custom_call.1} parent=1 // pred_check_branch
      %11 = sbr.rel (0) target = $region5
    $region4: #{tpu_custom_call.1} parent=1 // pred_region
      %s12 = sadd.s32 0, 0
      %p13 = scmp.lt.s32.totalorder %s12, 0
      %s14 = scalar_select %p13, %s12, 0
      %s15 = smul.u32 2, %s14
      %17 = vsyncadd [#allocation6], 0
      %s18 = smul.addr %s15, 8
      %s19 = scalar_lea.hbm %s0, %s18
      %s20 = sshll.u32 %s19, 4
      %s21 = int_to_ptr.hbm [resolvable:$true] %s20
      %s22 = sshll.u32 [#allocation5], 4
      %s23 = int_to_ptr.vmem [resolvable:$true] %s22
      %28 = dma.hbm_to_vmem [thread:$0]  %s21, 256, %s23, [#allocation6], 128, 128, 8
    $region5: #{tpu_custom_call.1} parent=1 // pred_fallthru
      _
    // Predicated region
    $region6: #{tpu_custom_call.1} parent=1 // pred_check
      _
    $region7: #{tpu_custom_call.1} parent=1 // pred_check_branch
      %30 = sbr.rel (0) target = $region9
    $region8: #{tpu_custom_call.1} parent=1 // pred_region
      %s31 = sadd.s32 0, 0
      %p32 = scmp.lt.s32.totalorder %s31, 0
      %s33 = scalar_select %p32, %s31, 0
      %s34 = smul.u32 2, %s33
      %36 = vsyncadd [#allocation9], 0
      %s37 = smul.addr %s34, 8
      %s38 = scalar_lea.hbm %s1, %s37
      %s39 = sshll.u32 %s38, 4
      %s40 = int_to_ptr.hbm [resolvable:$true] %s39
      %s41 = sshll.u32 [#allocation8], 4
      %s42 = int_to_ptr.vmem [resolvable:$true] %s41
      %47 = dma.hbm_to_vmem [thread:$0]  %s40, 256, %s42, [#allocation9], 128, 128, 8
    $region9: #{tpu_custom_call.1} parent=1 // pred_fallthru
      _
    // Predicated region
    $region10: #{tpu_custom_call.1} parent=1 // pred_check
      _
    $region11: #{tpu_custom_call.1} parent=1 // pred_check_branch
      %49 = sbr.rel (0) target = $region13
    $region12: #{tpu_custom_call.1} parent=1 // pred_region
      %51 = dma.done [#allocation6], 256
    $region13: #{tpu_custom_call.1} parent=1 // pred_fallthru
      _
    // Predicated region
    $region14: #{tpu_custom_call.1} parent=1 // pred_check
      _
    $region15: #{tpu_custom_call.1} parent=1 // pred_check_branch
      %53 = sbr.rel (0) target = $region17
    $region16: #{tpu_custom_call.1} parent=1 // pred_region
      %55 = dma.done [#allocation9], 256
    $region17: #{tpu_custom_call.1} parent=1 // pred_fallthru
      _
    %s56 = sadd.s32 0, 0
    %p57 = scmp.lt.s32.totalorder %s56, 0
    %s58 = scalar_select %p57, %s56, 0
    %s59 = smul.u32 2, %s58
    %s60 = sadd.s32 0, 0
    %p61 = scmp.lt.s32.totalorder %s60, 0
    %s62 = scalar_select %p61, %s60, 0
    %s63 = smul.u32 2, %s62
    %p64 = scmp.eq.s32.totalorder 0, 0
    // Predicated region
    $region18: #{tpu_custom_call.1} parent=1 // pred_check
      %p65 = pneg %p64
    $region19: #{tpu_custom_call.1} parent=1 // pred_check_branch
      %67 = sbr.rel (%p65) target = $region21
    $region20: #{tpu_custom_call.1} parent=1 // pred_region
      %vm68 = vcmask 253952
      %69 = vst.msk [vmem:[#allocation2] sm:$0x1] %vm68, 0.0
      %vm70 = vcmask 0
      %71 = vst.msk [vmem:[#allocation3] sm:$0x1] %vm70, 0.0
      %72 = vst.msk [vmem:[#allocation4] sm:$0x1] %vm70, 0.0
    $region21: #{tpu_custom_call.1} parent=1 // pred_fallthru
      _
    %s73 = sadd.s32 0, 0
    %s74 = smul.u32 %s73, 16
    %s75 = sadd.s32 %s74, 16
    %p76 = scmp.le.s32.totalorder %s75, 16
    // Predicated region
    $region22: #{tpu_custom_call.1} parent=1 // pred_check
      %p77 = pneg %p76
    $region23: #{tpu_custom_call.1} parent=1 // pred_check_branch
      %79 = sbr.rel (%p77) target = $region25
    $region24: #{tpu_custom_call.1} parent=1 // pred_region
      %v80 = vld [vmem:[#allocation5] sm:$0xff]
      %v81 = vld [vmem:[#allocation5 + $0x8] sm:$0xff]
      %v82 = vld [vmem:[#allocation8] sm:$0xff]
      %v83 = vld [vmem:[#allocation8 + $0x8] sm:$0xff]
      %vm84 = vcmask 261120
      %v85 = vsel %vm84, %v80, -inf
      %86 = vmax.xlane.f32.xlu0 %v85
      %v87 = vpop.xlane.xlu0 %86
      %v88 = vsel %vm84, %v81, -inf
      %89 = vmax.xlane.f32.xlu0 %v88
      %v90 = vpop.xlane.xlu0 %89
      %v91 = vsub.f32 %v80, %v87
      %v92 = vsub.f32 %v81, %v90
      %v93 = vmul.f32 %v91, 1.442695
      %v94 = vpow.pop %v93
      %v95 = vmul.f32 %v92, 1.442695
      %v96 = vpow.pop %v95
      %v97 = vsel %vm84, %v94, 0.0
      %98 = vadd.xlane.f32.xlu0 %v97
      %v99 = vpop.xlane.xlu0 %98
      %v100 = vsel %vm84, %v96, 0.0
      %101 = vadd.xlane.f32.xlu0 %v100
      %v102 = vpop.xlane.xlu0 %101
      %v103 = vlog2.pop %v99
      %v104 = vmul.f32 %v103, 0.6931472
      %v105 = vlog2.pop %v102
      %v106 = vmul.f32 %v105, 0.6931472
      %v107 = vsel %vm84, %v82, 0.0
      %108 = vadd.xlane.f32.xlu0 %v107
      %v109 = vpop.xlane.xlu0 %108
      %v110 = vsel %vm84, %v83, 0.0
      %111 = vadd.xlane.f32.xlu0 %v110
      %v112 = vpop.xlane.xlu0 %111
      %v113 = vld [vmem:[#allocation2] sm:$0x1]
      %v114 = vmul.f32 %v82, %v91
      %v115 = vmul.f32 %v83, %v92
      %v116 = vsel %vm84, %v114, 0.0
      %v117 = vsel %vm84, %v115, 0.0
      %v118 = vadd.f32 %v116, %v117
      %v119 = vrot.slane %v118, 4
      %v120 = vadd.f32 %v118, %v119
      %v121 = vrot.slane %v120, 2
      %v122 = vadd.f32 %v120, %v121
      %v123 = vrot.slane %v122, 1
      %v124 = vadd.f32 %v122, %v123
      %v125 = vadd.f32 %v113, %v124
      %vm126 = vcmask 253952
      %127 = vst.msk [vmem:[#allocation2] sm:$0x1] %vm126, %v125
      %v128 = vld [vmem:[#allocation4] sm:$0x1]
      %v129 = vmul.f32 %v109, %v104
      %v130 = vmul.f32 %v112, %v106
      %v131 = vadd.f32 %v129, %v130
      %v132 = vrot.slane %v131, 4
      %v133 = vadd.f32 %v131, %v132
      %v134 = vrot.slane %v133, 2
      %v135 = vadd.f32 %v133, %v134
      %v136 = vrot.slane %v135, 1
      %v137 = vadd.f32 %v135, %v136
      %v138 = vadd.f32 %v128, %v137
      %vm139 = vcmask 0
      %140 = vst.msk [vmem:[#allocation4] sm:$0x1] %vm139, %v138
      %v141 = vld [vmem:[#allocation3] sm:$0x1]
      %v142 = vadd.f32 %v109, %v112
      %v143 = vrot.slane %v142, 4
      %v144 = vadd.f32 %v142, %v143
      %v145 = vrot.slane %v144, 2
      %v146 = vadd.f32 %v144, %v145
      %v147 = vrot.slane %v146, 1
      %v148 = vadd.f32 %v146, %v147
      %v149 = vadd.f32 %v141, %v148
      %150 = vst.msk [vmem:[#allocation3] sm:$0x1] %vm139, %v149
    $region25: #{tpu_custom_call.1} parent=1 // pred_fallthru
      _
    %p151 = scmp.gt.s32.totalorder %s75, 16
    // Predicated region
    $region26: #{tpu_custom_call.1} parent=1 // pred_check
      %p152 = pneg %p151
    $region27: #{tpu_custom_call.1} parent=1 // pred_check_branch
      %154 = sbr.rel (%p152) target = $region29
    $region28: #{tpu_custom_call.1} parent=1 // pred_region
      %v155 = vld [vmem:[#allocation5] sm:$0xff]
      %v156 = vld [vmem:[#allocation5 + $0x8] sm:$0xff]
      %v157 = vld [vmem:[#allocation8] sm:$0xff]
      %v158 = vld [vmem:[#allocation8 + $0x8] sm:$0xff]
      %v159 = vlaneseq
      %v160 = vshrl.u32 %v159, 7
      %v161 = vadd.s32 %v160, 8
      %v162 = vstv %s74
      %v163 = vadd.s32 %v162, %v160
      %v164 = vadd.s32 %v162, %v161
      %vm165 = vcmp.lt.s32.totalorder %v163, 16
      %vm166 = vcmp.lt.s32.totalorder %v164, 16
      %v167 = vsel %vm165, 1, 0
      %v168 = vsel %vm166, 1, 0
      %vm169 = vcmp.eq.s32.totalorder %v167, 1
      %vm170 = vcmp.eq.s32.totalorder %v168, 1
      %v171 = vsel %vm169, %v155, 0.0
      %v172 = vsel %vm170, %v156, 0.0
      %v173 = vsel %vm169, %v157, 0.0
      %v174 = vsel %vm170, %v158, 0.0
      %vm175 = vcmask 261120
      %v176 = vsel %vm175, %v171, -inf
      %177 = vmax.xlane.f32.xlu0 %v176
      %v178 = vpop.xlane.xlu0 %177
      %v179 = vsel %vm175, %v172, -inf
      %180 = vmax.xlane.f32.xlu0 %v179
      %v181 = vpop.xlane.xlu0 %180
      %v182 = vsub.f32 %v171, %v178
      %v183 = vsub.f32 %v172, %v181
      %v184 = vmul.f32 %v182, 1.442695
      %v185 = vpow.pop %v184
      %v186 = vmul.f32 %v183, 1.442695
      %v187 = vpow.pop %v186
      %v188 = vsel %vm175, %v185, 0.0
      %189 = vadd.xlane.f32.xlu0 %v188
      %v190 = vpop.xlane.xlu0 %189
      %v191 = vsel %vm175, %v187, 0.0
      %192 = vadd.xlane.f32.xlu0 %v191
      %v193 = vpop.xlane.xlu0 %192
      %v194 = vlog2.pop %v190
      %v195 = vmul.f32 %v194, 0.6931472
      %v196 = vlog2.pop %v193
      %v197 = vmul.f32 %v196, 0.6931472
      %v198 = vsel %vm175, %v173, 0.0
      %199 = vadd.xlane.f32.xlu0 %v198
      %v200 = vpop.xlane.xlu0 %199
      %v201 = vsel %vm175, %v174, 0.0
      %202 = vadd.xlane.f32.xlu0 %v201
      %v203 = vpop.xlane.xlu0 %202
      %v204 = vld [vmem:[#allocation2] sm:$0x1]
      %v205 = vmul.f32 %v173, %v182
      %v206 = vmul.f32 %v174, %v183
      %v207 = vsel %vm175, %v205, 0.0
      %v208 = vsel %vm175, %v206, 0.0
      %v209 = vadd.f32 %v207, %v208
      %v210 = vrot.slane %v209, 4
      %v211 = vadd.f32 %v209, %v210
      %v212 = vrot.slane %v211, 2
      %v213 = vadd.f32 %v211, %v212
      %v214 = vrot.slane %v213, 1
      %v215 = vadd.f32 %v213, %v214
      %v216 = vadd.f32 %v204, %v215
      %vm217 = vcmask 253952
      %218 = vst.msk [vmem:[#allocation2] sm:$0x1] %vm217, %v216
      %v219 = vld [vmem:[#allocation4] sm:$0x1]
      %v220 = vmul.f32 %v200, %v195
      %v221 = vmul.f32 %v203, %v197
      %v222 = vadd.f32 %v220, %v221
      %v223 = vrot.slane %v222, 4
      %v224 = vadd.f32 %v222, %v223
      %v225 = vrot.slane %v224, 2
      %v226 = vadd.f32 %v224, %v225
      %v227 = vrot.slane %v226, 1
      %v228 = vadd.f32 %v226, %v227
      %v229 = vadd.f32 %v219, %v228
      %vm230 = vcmask 0
      %231 = vst.msk [vmem:[#allocation4] sm:$0x1] %vm230, %v229
      %v232 = vld [vmem:[#allocation3] sm:$0x1]
      %v233 = vadd.f32 %v200, %v203
      %v234 = vrot.slane %v233, 4
      %v235 = vadd.f32 %v233, %v234
      %v236 = vrot.slane %v235, 2
      %v237 = vadd.f32 %v235, %v236
      %v238 = vrot.slane %v237, 1
      %v239 = vadd.f32 %v237, %v238
      %v240 = vadd.f32 %v232, %v239
      %241 = vst.msk [vmem:[#allocation3] sm:$0x1] %vm230, %v240
    $region29: #{tpu_custom_call.1} parent=1 // pred_fallthru
      _
    // Predicated region
    $region30: #{tpu_custom_call.1} parent=1 // pred_check
      %p242 = pneg %p64
    $region31: #{tpu_custom_call.1} parent=1 // pred_check_branch
      %244 = sbr.rel (%p242) target = $region33
    $region32: #{tpu_custom_call.1} parent=1 // pred_region
      %v245 = vld [vmem:[#allocation2] sm:$0x1]
      %vm246 = vcmask 253952
      %v247 = vsel %vm246, %v245, 0.0
      %248 = vadd.xlane.f32.xlu0 %v247
      %v249 = vpop.xlane.xlu0 %248
      %v250 = vrot.slane %v249, 4
      %v251 = vadd.f32 %v249, %v250
      %v252 = vrot.slane %v251, 2
      %v253 = vadd.f32 %v251, %v252
      %v254 = vrot.slane %v253, 1
      %v255 = vadd.f32 %v253, %v254
      %s256 = vtos %v255
      %v257 = vld [vmem:[#allocation4] sm:$0x1]
      %v258 = vadd.f32 %v257, 0.0
      %s259 = vtos %v258
      %s260 = ssub.f32 %s256, %s259
      %s261 = scalar_lea.smem [#allocation10], 0
      %262 = sst [smem:[%s261]] %s260
      %v263 = vld [vmem:[#allocation3] sm:$0x1]
      %v264 = vadd.f32 %v263, 0.0
      %s265 = vtos %v264
      %s266 = scalar_lea.smem [#allocation10], 1
      %267 = sst [smem:[%s266]] %s265
    $region33: #{tpu_custom_call.1} parent=1 // pred_fallthru
      _
    // Predicated region
    $region34: #{tpu_custom_call.1} parent=1 // pred_check
      _
    $region35: #{tpu_custom_call.1} parent=1 // pred_check_branch
      %269 = sbr.rel (0) target = $region37
    $region36: #{tpu_custom_call.1} parent=1 // pred_region
      %271 = vsyncadd [#allocation7], 0
      %s273 = sshll.u32 %s2, 4
      %s274 = int_to_ptr.hbm [resolvable:$true] %s273
      %276 = dma.smem_to_hbm [#allocation10], 16, %s274, [#allocation7]
    $region37: #{tpu_custom_call.1} parent=1 // pred_fallthru
      _
    // Predicated region
    $region38: #{tpu_custom_call.1} parent=1 // pred_check
      _
    $region39: #{tpu_custom_call.1} parent=1 // pred_check_branch
      %278 = sbr.rel (0) target = $region41
    $region40: #{tpu_custom_call.1} parent=1 // pred_region
      %280 = dma.done [#allocation7], 16
    $region41: #{tpu_custom_call.1} parent=1 // pred_fallthru
      _
    %281 = sfence
    %282 = vsyncpa [#allocation6], 1
    %283 = vsyncpa [#allocation9], 1
    %284 = vsyncpa [#allocation7], 1

</llo_original>
